<compile_context>
chip_gen: v5e
topology: v5e:2x2
jax: 0.10.0
libtpu: 0.0.40
codegen_flags: <defaults>
</compile_context>

<pallas_src>
import jax
import jax.numpy as jnp
from jax.experimental import pallas as pl
from jax.experimental.pallas import tpu as pltpu


def _mask_softmax_kernel(thr_ref, x_ref, o_ref):
    # thr_ref: (TB, 1, 1) int32  -- per-head valid length (rows >= thr are masked)
    # x_ref / o_ref: (TB, TQ, L) tiles; softmax over the last (lane) axis.
    TB, TQ, L = x_ref.shape
    q_off = pl.program_id(1) * TQ

    x = x_ref[...].astype(jnp.float32)
    thr = thr_ref[...]                                              # (TB, 1, 1)
    row = jax.lax.broadcasted_iota(jnp.int32, (TB, TQ, L), 1) + q_off
    # masked_fill(mask, -1e7) with mask = (global query row >= seqlen[head's batch])
    masked = jnp.where(row >= thr, jnp.float32(-10000000.0), x)

    # softmax(abs(masked), axis=-1), numerically stable
    a = jnp.abs(masked)
    a_max = jnp.max(a, axis=-1, keepdims=True)
    e = jnp.exp(a - a_max)
    denom = jnp.sum(e, axis=-1, keepdims=True)
    r = pl.reciprocal(denom, approx=True)       # EUP slot
    r = r * (2.0 - denom * r)                   # one Newton step -> full f32 accuracy
    o_ref[...] = (e * r).astype(o_ref.dtype)


def _choose_tiles(BE, L, itemsize, target_bytes=2 << 20):
    """Pick (TB, TQ) so each x block is ~MiB-scale and divides the arrays."""
    slice_bytes = L * L * itemsize
    if slice_bytes <= target_bytes:
        tq = L
        tb = max(1, min(BE, target_bytes // max(1, slice_bytes)))
        if BE >= 4:
            tb = min(tb, BE // 2)      # keep >= 2 grid steps (v7x has 2 TensorCores)
        while BE % tb:                 # largest divisor of BE <= tb
            tb -= 1
    else:
        tb = 1
        if L % 8 == 0:
            tq = 8
            while (tq * 2) <= L and L % (tq * 2) == 0 and (tq * 2) * L * itemsize <= target_bytes:
                tq *= 2
        else:
            tq = L   # TODO(synk): odd L with huge rows would need padded query tiles
    return tb, tq


def mask_softmax_input(x, seqlen, E):
    """x: (B*E, L, L) attention scores; seqlen: length-B valid lengths.

    Returns softmax(abs(masked_fill(x, mask, -1e7)), axis=-1) with the module's mask
    (rows >= seqlen[batch] are masked for every head of that batch).
    """
    BE, L, L2 = x.shape
    assert L == L2, "expected square (query, key) attention scores"
    assert BE % E == 0
    B = BE // E

    # Per-head row threshold (tiny int32 tensor) replaces the (BE, L, L) f32 mask.
    seqlen = jnp.asarray(seqlen, dtype=jnp.int32).reshape(B)
    thr = jnp.repeat(seqlen, E).reshape(BE, 1, 1)

    itemsize = jnp.dtype(x.dtype).itemsize
    TB, TQ = _choose_tiles(BE, L, itemsize)
    grid = (BE // TB, L // TQ)

    x_spec = pl.BlockSpec((TB, TQ, L), lambda b, q: (b, q, 0))
    thr_spec = pl.BlockSpec((TB, 1, 1), lambda b, q: (b, 0, 0))

    # x block + out block, double-buffered, plus slack; cap at 64 MiB for v7x.
    block_bytes = TB * TQ * L * (itemsize + itemsize)
    vmem_limit = int(min(64 << 20, max(16 << 20, 4 * block_bytes + (2 << 20))))

    return pl.pallas_call(
        _mask_softmax_kernel,
        out_shape=jax.ShapeDtypeStruct((BE, L, L), x.dtype),
        grid_spec=pltpu.PrefetchScalarGridSpec(
            num_scalar_prefetch=0,
            grid=grid,
            in_specs=[thr_spec, x_spec],
            out_specs=x_spec,
        ),
        compiler_params=pltpu.CompilerParams(
            dimension_semantics=("parallel", "parallel"),
            vmem_limit_bytes=vmem_limit,
        ),
    )(thr, x)


# ------------------------- host-side reference (for checks) -------------------------

def build_mask(seqlen, B, E, maxlen):
    """Deterministic reconstruction of the module's __init__ mask (plain JAX)."""
    row_idx = jnp.arange(maxlen)[None, :, None]                                   # (1, L, 1)
    per_batch = (row_idx >= jnp.asarray(seqlen)[:, None, None]).astype(jnp.float32)
    per_batch = jnp.broadcast_to(per_batch, (B, maxlen, maxlen))                  # (B, L, L)
    return jnp.repeat(per_batch, E, axis=0)                                       # (B*E, L, L)


def reference(x, mask):
    masked = jnp.where(mask != 0, jnp.float32(-10000000.0), x)
    a = jnp.abs(masked)
    a = a - jnp.max(a, axis=-1, keepdims=True)
    e = jnp.exp(a)
    return e / jnp.sum(e, axis=-1, keepdims=True)


if __name__ == "__main__":
    # Small, deterministic configuration consistent with the module:
    #   para.B = 2 utterances, para.E = 4 heads, maxlen = 16 frames,
    #   seqlen = [16, 12]  (second utterance is padded).
    B, E, maxlen = 2, 4, 16
    seqlen = [16, 12]
    BE = B * E

    key = jax.random.PRNGKey(0)
    x = jax.random.normal(key, (BE, maxlen, maxlen), dtype=jnp.float32)

    out = mask_softmax_input(x, seqlen, E)
    out = jax.block_until_ready(out)

    ref = reference(x, build_mask(seqlen, B, E, maxlen))
    assert out.shape == (BE, maxlen, maxlen)
    assert out.dtype == x.dtype
    assert jnp.allclose(out, ref, atol=1e-5, rtol=1e-5), "mismatch vs reference"
    # masked rows (batch 1, rows >= 12) collapse to uniform 1/maxlen
    assert jnp.allclose(out[E:, 12:, :], 1.0 / maxlen, atol=1e-5)

    print("KERNEL_OK")
</pallas_src>

<mosaic_0001>
module attributes {stable_mosaic.version = 11 : i64} {
  func.func @_mask_softmax_kernel(%arg0: i32, %arg1: i32, %arg2: memref<4x1x1xi32, #tpu.memory_space<vmem>>, %arg3: memref<4x16x16xf32, #tpu.memory_space<vmem>>, %arg4: memref<4x16x16xf32, #tpu.memory_space<vmem>>) attributes {dimension_semantics = [#tpu.dimension_semantics<parallel>, #tpu.dimension_semantics<parallel>], iteration_bounds = array<i64: 2, 1>, scalar_prefetch = 0 : i64, scratch_operands = 0 : i64, tpu.core_type = #tpu.core_type<tc>, window_params = [{transform_indices = @transform_0, window_bounds = array<i64: 4, 1, 1>}, {transform_indices = @transform_1, window_bounds = array<i64: 4, 16, 16>}, {transform_indices = @transform_2, window_bounds = array<i64: 4, 16, 16>}]} {
    %c16_i32 = arith.constant 16 : i32
    %0 = arith.muli %arg1, %c16_i32 : i32
    %c0 = arith.constant 0 : index
    %c0_0 = arith.constant 0 : index
    %c0_1 = arith.constant 0 : index
    %1 = vector.load %arg3[%c0, %c0_0, %c0_1] : memref<4x16x16xf32, #tpu.memory_space<vmem>>, vector<4x16x16xf32>
    %c0_2 = arith.constant 0 : index
    %c0_3 = arith.constant 0 : index
    %c0_4 = arith.constant 0 : index
    %2 = vector.load %arg2[%c0_2, %c0_3, %c0_4] : memref<4x1x1xi32, #tpu.memory_space<vmem>>, vector<4x1x1xi32>
    %3 = tpu.iota {dimensions = array<i32: 1>} : vector<4x16x16xi32>
    %4 = vector.broadcast %0 : i32 to vector<4x16x16xi32>
    %5 = arith.addi %3, %4 : vector<4x16x16xi32>
    %6 = vector.broadcast %2 : vector<4x1x1xi32> to vector<4x16x16xi32>
    %7 = arith.cmpi sge, %5, %6 : vector<4x16x16xi32>
    %cst = arith.constant -1.000000e+07 : f32
    %8 = vector.broadcast %cst : f32 to vector<4x16x16xf32>
    %9 = arith.select %7, %8, %1 : vector<4x16x16xi1>, vector<4x16x16xf32>
    %10 = math.absf %9 : vector<4x16x16xf32>
    %cst_5 = arith.constant dense<0xFF800000> : vector<4x16xf32>
    %11 = vector.multi_reduction <maximumf>, %10, %cst_5 [2] : vector<4x16x16xf32> to vector<4x16xf32>
    %12 = vector.shape_cast %11 : vector<4x16xf32> to vector<4x16x1xf32>
    %13 = vector.broadcast %12 : vector<4x16x1xf32> to vector<4x16x16xf32>
    %14 = arith.subf %10, %13 : vector<4x16x16xf32>
    %15 = math.exp %14 : vector<4x16x16xf32>
    %cst_6 = arith.constant dense<0.000000e+00> : vector<4x16xf32>
    %16 = vector.multi_reduction <add>, %15, %cst_6 [2] : vector<4x16x16xf32> to vector<4x16xf32>
    %17 = vector.shape_cast %16 : vector<4x16xf32> to vector<4x16x1xf32>
    %18 = tpu.reciprocal %17 {approx = true} : vector<4x16x1xf32> -> vector<4x16x1xf32>
    %19 = arith.mulf %17, %18 : vector<4x16x1xf32>
    %cst_7 = arith.constant 2.000000e+00 : f32
    %20 = vector.broadcast %cst_7 : f32 to vector<4x16x1xf32>
    %21 = arith.subf %20, %19 : vector<4x16x1xf32>
    %22 = arith.mulf %18, %21 : vector<4x16x1xf32>
    %23 = vector.broadcast %22 : vector<4x16x1xf32> to vector<4x16x16xf32>
    %24 = arith.mulf %15, %23 : vector<4x16x16xf32>
    %c0_8 = arith.constant 0 : index
    %c0_9 = arith.constant 0 : index
    %c0_10 = arith.constant 0 : index
    %25 = vector.load %arg4[%c0_8, %c0_9, %c0_10] : memref<4x16x16xf32, #tpu.memory_space<vmem>>, vector<4x16x16xf32>
    tpu.vector_store %arg4[%c0_8, %c0_9, %c0_10], %24 {strides = array<i32>} : memref<4x16x16xf32, #tpu.memory_space<vmem>>, vector<4x16x16xf32>,
    return
  }
  func.func @transform_0(%arg0: i32, %arg1: i32) -> (i32, i32, i32) {
    %c0_i32 = arith.constant 0 : i32
    %c0_i32_0 = arith.constant 0 : i32
    %c0_i32_1 = arith.constant 0 : i32
    return %arg0, %c0_i32, %c0_i32_0 : i32, i32, i32
  }
  func.func @transform_1(%arg0: i32, %arg1: i32) -> (i32, i32, i32) {
    %c0_i32 = arith.constant 0 : i32
    %c0_i32_0 = arith.constant 0 : i32
    return %arg0, %arg1, %c0_i32 : i32, i32, i32
  }
  func.func @transform_2(%arg0: i32, %arg1: i32) -> (i32, i32, i32) {
    %c0_i32 = arith.constant 0 : i32
    %c0_i32_0 = arith.constant 0 : i32
    return %arg0, %arg1, %c0_i32 : i32, i32, i32
  }
}

</mosaic_0001>

<llo_original>
// kernel: tpu_custom_call.1
$region0: #{tpu_custom_call.1}
  #allocation0 [shape = 'u32[]', space=smem, size = 0x4, offset = 0x4, fixed_abs, tag = 'smem constant byte address 0x4 - core index']
  #allocation1 [shape = 'u32[72,128]{1,0:T(1,128)}', space=vmem, size = 0x9000, scoped, tag = 'internal scratch']
  %s0 = inlined_call_operand.vmem [shape: s32[8,1,1], index: 0, kind: input, shape index: {}]
  %s1 = inlined_call_operand.hbm [shape: f32[8,16,16], index: 1, kind: input, shape index: {}]
  %s2 = inlined_call_operand.hbm [shape: f32[8,16,16], index: 2, kind: output, shape index: {}]
  %s3 = sld [smem:[#allocation0]]
  $region45: #{tpu_custom_call.1} parent=0
    _
  %s5 = ssub.s32 1, %s3
  %s6 = scalar_select 0, %s5, %s3
  $region1: #{tpu_custom_call.1} parent=0
    #allocation2 [shape = 'u8[65536]{0}', space=vmem, size = 0x10000, scoped, tag = 'input window, operand 1']
    #allocation3 [shape = 's32[2]{0}', space=sflag, size = 0x8, scoped, tag = 'scoped memory for tpu_custom_call.1']
    #allocation4 [shape = 's32[2]{0}', space=sflag, size = 0x8, scoped, tag = 'scoped memory for tpu_custom_call.1']
    #allocation5 [shape = 'u8[65536]{0}', space=vmem, size = 0x10000, scoped, tag = 'output window, operand 0']
    %7 = vsyncpa [#allocation3], 0
    %s8 = scalar_lea.sflag [#allocation3], 1
    %9 = vsyncpa %s8, 0
    %10 = vsyncpa [#allocation4], 0
    %s11 = scalar_lea.sflag [#allocation4], 1
    %12 = vsyncpa %s11, 0
    loop: start=0, step=1, limit=4
    $region2: #{tpu_custom_call.1} parent=1 // loop_pre_header
      _
    $region3: #{tpu_custom_call.1} parent=1 // loop_header
      %s14 = sphi 0, %s18
      %p15 = scmp.ge.s32.totalorder %s14, 4
      %s21 = sphi 0, %s33
      %s22 = sphi 0, %s29
      %s23 = sphi 0, %s21
      %s24 = sphi 0, %s22
      %s25 = sphi 0, %s23
      %s26 = sphi 0, %s24
      %s36 = sphi 0, %s38
      %s39 = sphi 0, %s36
      %s40 = sphi 0, %s39
      %s56 = sphi 0, %s40
      %s64 = sphi 0, %s66
      %s67 = sphi 0, %s64
      %s68 = sphi 0, %s67
      %s84 = sphi 0, %s68
      %s92 = sphi 0, %s94
      %s95 = sphi 0, %s92
      %s96 = sphi 0, %s95
      %s112 = sphi 0, %s96
    $region4: #{tpu_custom_call.1} parent=1 // loop_header_branch
      %17 = sbr.rel (%p15) target = $region8
    $region5: #{tpu_custom_call.1} parent=1 // loop_body
      %s19 = ssub.s32 %s14, 1
      %s20 = ssub.s32 %s14, 2
      %s27 = sadd.s32 1, %s22
      %p28 = scmp.ge.s32.totalorder %s27, 1
      %s29 = scalar_select %p28, 0, %s27
      %s30 = sadd.s32 1, %s21
      %s31 = scalar_select %p28, %s30, %s21
      %p32 = scmp.ge.s32.totalorder %s31, 2
      %s33 = scalar_select %p32, 0, %s31
      %s34 = ssub.s32 %s21, %s33
      %p35 = scmp.eq.s32.totalorder %s34, 0
      %s37 = sadd.s32 %s36, 1
      %s38 = scalar_select %p35, %s36, %s37
      %p41 = pneg %p35
      %p42 = scmp.eq.s32.totalorder %s14, 1
      %p43 = por %p41, %p42
      %p44 = scmp.ne.s32.totalorder %s36, %s39
      %p45 = scmp.eq.s32.totalorder %s14, 0
      %p46 = por %p44, %p45
      %p47 = scmp.ne.s32.totalorder %s36, %s39
      %p48 = scmp.eq.s32.totalorder %s19, 1
      %p49 = por %p47, %p48
      %p50 = scmp.ne.s32.totalorder %s39, %s40
      %p51 = scmp.eq.s32.totalorder %s19, 0
      %p52 = por %p50, %p51
      %p53 = scmp.ne.s32.totalorder %s39, %s40
      %p54 = scmp.eq.s32.totalorder %s20, 1
      %p55 = por %p53, %p54
      %p57 = scmp.ne.s32.totalorder %s40, %s56
      %p58 = scmp.eq.s32.totalorder %s20, 0
      %p59 = por %p57, %p58
      %s60 = ssub.s32 %s21, %s33
      %s61 = ssub.s32 %s22, %s29
      %s62 = sor.u32 %s60, %s61
      %p63 = scmp.eq.s32.totalorder %s62, 0
      %s65 = sadd.s32 %s64, 1
      %s66 = scalar_select %p63, %s64, %s65
      %p69 = pneg %p63
      %p70 = scmp.eq.s32.totalorder %s14, 1
      %p71 = por %p69, %p70
      %p72 = scmp.ne.s32.totalorder %s64, %s67
      %p73 = scmp.eq.s32.totalorder %s14, 0
      %p74 = por %p72, %p73
      %p75 = scmp.ne.s32.totalorder %s64, %s67
      %p76 = scmp.eq.s32.totalorder %s19, 1
      %p77 = por %p75, %p76
      %p78 = scmp.ne.s32.totalorder %s67, %s68
      %p79 = scmp.eq.s32.totalorder %s19, 0
      %p80 = por %p78, %p79
      %p81 = scmp.ne.s32.totalorder %s67, %s68
      %p82 = scmp.eq.s32.totalorder %s20, 1
      %p83 = por %p81, %p82
      %p85 = scmp.ne.s32.totalorder %s68, %s84
      %p86 = scmp.eq.s32.totalorder %s20, 0
      %p87 = por %p85, %p86
      %s88 = ssub.s32 %s21, %s33
      %s89 = ssub.s32 %s22, %s29
      %s90 = sor.u32 %s88, %s89
      %p91 = scmp.eq.s32.totalorder %s90, 0
      %s93 = sadd.s32 %s92, 1
      %s94 = scalar_select %p91, %s92, %s93
      %p97 = pneg %p91
      %p98 = scmp.eq.s32.totalorder %s14, 1
      %p99 = por %p97, %p98
      %p100 = scmp.ne.s32.totalorder %s92, %s95
      %p101 = scmp.eq.s32.totalorder %s14, 0
      %p102 = por %p100, %p101
      %p103 = scmp.ne.s32.totalorder %s92, %s95
      %p104 = scmp.eq.s32.totalorder %s19, 1
      %p105 = por %p103, %p104
      %p106 = scmp.ne.s32.totalorder %s95, %s96
      %p107 = scmp.eq.s32.totalorder %s19, 0
      %p108 = por %p106, %p107
      %p109 = scmp.ne.s32.totalorder %s95, %s96
      %p110 = scmp.eq.s32.totalorder %s20, 1
      %p111 = por %p109, %p110
      %p113 = scmp.ne.s32.totalorder %s96, %s112
      %p114 = scmp.eq.s32.totalorder %s20, 0
      %p115 = por %p113, %p114
      %p116 = scmp.le.s32.totalorder 1, %s14
      %p117 = scmp.lt.s32.totalorder %s14, 3
      %p118 = pnand %p116, %p117
      %p119 = pneg %p118
      // Predicated region
      $region9: #{tpu_custom_call.1} parent=5 // pred_check
        _
      $region10: #{tpu_custom_call.1} parent=5 // pred_check_branch
        %121 = sbr.rel (%p118) target = $region12
      $region11: #{tpu_custom_call.1} parent=5 // pred_region
        %s122 = ssub.s32 %s14, 1
      $region12: #{tpu_custom_call.1} parent=5 // pred_fallthru
        _
      %p123 = scmp.lt.s32.totalorder %s14, 2
      // Predicated region
      $region13: #{tpu_custom_call.1} parent=5 // pred_check
        %p124 = pneg %p123
      $region14: #{tpu_custom_call.1} parent=5 // pred_check_branch
        %126 = sbr.rel (%p124) target = $region16
      $region15: #{tpu_custom_call.1} parent=5 // pred_region
        // Predicated region
        $region17: #{tpu_custom_call.1} parent=15 // pred_check
          %p127 = pneg %p46
        $region18: #{tpu_custom_call.1} parent=15 // pred_check_branch
          %129 = sbr.rel (%p127) target = $region20
        $region19: #{tpu_custom_call.1} parent=15 // pred_region
          %s130 = smul.u32 4, %s21
          %p131 = scmp.lt.s32.totalorder %s130, 7
          %s132 = scalar_select %p131, %s130, 7
          %s133 = scalar_lea.vmem %s0, %s132
          %s134 = smul.u32 4, %s21
        $region20: #{tpu_custom_call.1} parent=15 // pred_fallthru
          _
        // Predicated region
        $region21: #{tpu_custom_call.1} parent=15 // pred_check
          %p135 = pneg %p74
        $region22: #{tpu_custom_call.1} parent=15 // pred_check_branch
          %137 = sbr.rel (%p135) target = $region24
        $region23: #{tpu_custom_call.1} parent=15 // pred_region
          %s138 = sand.u32 %s64, 1
          %s139 = scalar_lea.sflag [#allocation3], %s138
          %s140 = sand.u32 %s64, 1
          %s141 = smul.addr %s140, 64
          %s142 = scalar_lea.vmem [#allocation2], %s141
          %s143 = smul.u32 4, %s21
          %s144 = smul.u32 2, %s22
          %146 = vsyncadd %s139, 0
          %s147 = smul.addr %s143, 2
          %s148 = sadd.s32 %s144, %s147
          %s149 = smul.addr %s148, 8
          %s150 = scalar_lea.hbm %s1, %s149
          %s151 = sshll.u32 %s150, 4
          %s152 = int_to_ptr.hbm [resolvable:$true] %s151
          %s153 = sshll.u32 %s142, 4
          %s154 = int_to_ptr.vmem [resolvable:$true] %s153
          %159 = dma.hbm_to_vmem [thread:$0]  %s152, 1024, %s154, %s139, 128, 128, 8
        $region24: #{tpu_custom_call.1} parent=15 // pred_fallthru
          _
      $region16: #{tpu_custom_call.1} parent=5 // pred_fallthru
        _
      %p160 = scmp.le.s32.totalorder 1, %s14
      %p161 = scmp.lt.s32.totalorder %s14, 3
      %p162 = pnand %p160, %p161
      %p163 = pneg %p162
      // Predicated region
      $region25: #{tpu_custom_call.1} parent=5 // pred_check
        _
      $region26: #{tpu_custom_call.1} parent=5 // pred_check_branch
        %165 = sbr.rel (%p162) target = $region28
      $region27: #{tpu_custom_call.1} parent=5 // pred_region
        %s166 = ssub.s32 %s14, 1
        %s167 = sand.u32 %s67, 1
        %s168 = scalar_lea.sflag [#allocation3], %s167
        %s169 = sand.u32 %s67, 1
        %s170 = smul.addr %s169, 64
        %s171 = scalar_lea.vmem [#allocation2], %s170
        // Predicated region
        $region29: #{tpu_custom_call.1} parent=27 // pred_check
          %p172 = pneg %p80
        $region30: #{tpu_custom_call.1} parent=27 // pred_check_branch
          %174 = sbr.rel (%p172) target = $region32
        $region31: #{tpu_custom_call.1} parent=27 // pred_region
          %176 = dma.done %s168, 1024
        $region32: #{tpu_custom_call.1} parent=27 // pred_fallthru
          _
        %s177 = smul.u32 4, %s23
        %p178 = scmp.lt.s32.totalorder %s177, 7
        %s179 = scalar_select %p178, %s177, 7
        %s180 = scalar_lea.vmem %s0, %s179
        %p181 = pneg %p52
        %p182 = pneg %p49
        %s183 = sand.u32 %s67, 1
        %s184 = scalar_lea.sflag [#allocation3], %s183
        %s185 = sand.u32 %s67, 1
        %s186 = smul.addr %s185, 64
        %s187 = scalar_lea.vmem [#allocation2], %s186
        %p188 = pneg %p80
        %p189 = pneg %p77
        %p190 = pneg %p108
        %p191 = pneg %p105
        %s192 = sand.u32 %s95, 1
        %s193 = scalar_lea.sflag [#allocation4], %s192
        %s194 = sand.u32 %s95, 1
        %s195 = smul.addr %s194, 64
        %s196 = scalar_lea.vmem [#allocation5], %s195
        %s197 = smul.u32 4, %s23
        %p198 = scmp.lt.s32.totalorder %s197, 7
        %s199 = scalar_select %p198, %s197, 7
        %s200 = scalar_lea.vmem %s0, %s199
        %s201 = smul.u32 4, %s23
        %s202 = smul.u32 4, %s23
        %s203 = smul.u32 2, %s24
        %s204 = smul.u32 4, %s23
        %s205 = smul.u32 2, %s24
        %s206 = smul.u32 %s24, 16
        %v207 = vld [vmem:[%s171] sm:$0xff]
        %v208 = vld [vmem:[%s171 + $0x8] sm:$0xff]
        %v209 = vld [vmem:[%s171 + $0x10] sm:$0xff]
        %v210 = vld [vmem:[%s171 + $0x18] sm:$0xff]
        %v211 = vld [vmem:[%s171 + $0x20] sm:$0xff]
        %v212 = vld [vmem:[%s171 + $0x28] sm:$0xff]
        %v213 = vld [vmem:[%s171 + $0x30] sm:$0xff]
        %v214 = vld [vmem:[%s171 + $0x38] sm:$0xff]
        %v215 = vld [vmem:[%s200] sm:$0x1]
        %v216 = vld [vmem:[%s200 + $0x1] sm:$0x1]
        %v217 = vld [vmem:[%s200 + $0x2] sm:$0x1]
        %v218 = vld [vmem:[%s200 + $0x3] sm:$0x1]
        %v219 = vlaneseq
        %v220 = vshrl.u32 %v219, 7
        %v221 = vadd.s32 %v220, 8
        %v222 = vstv %s206
        %v223 = vadd.s32 %v220, %v222
        %v224 = vadd.s32 %v221, %v222
        %v225 = vperm.slane %v215, 0
        %v226 = vperm.slane %v216, 0
        %v227 = vperm.slane %v217, 0
        %v228 = vperm.slane %v218, 0
        %229 = vset.pattern.permute.xlu0 0
        %230 = vperm.xlu0 %229, %v225
        %v231 = vpop.permute.xlu0 %230
        %232 = vset.pattern.permute.xlu0 0
        %233 = vperm.xlu0 %232, %v226
        %v234 = vpop.permute.xlu0 %233
        %235 = vset.pattern.permute.xlu0 0
        %236 = vperm.xlu0 %235, %v227
        %v237 = vpop.permute.xlu0 %236
        %238 = vset.pattern.permute.xlu0 0
        %239 = vperm.xlu0 %238, %v228
        %v240 = vpop.permute.xlu0 %239
        %vm241 = vcmp.ge.s32.totalorder %v223, %v231
        %vm242 = vcmp.ge.s32.totalorder %v224, %v231
        %vm243 = vcmp.ge.s32.totalorder %v223, %v234
        %vm244 = vcmp.ge.s32.totalorder %v224, %v234
        %vm245 = vcmp.ge.s32.totalorder %v223, %v237
        %vm246 = vcmp.ge.s32.totalorder %v224, %v237
        %vm247 = vcmp.ge.s32.totalorder %v223, %v240
        %vm248 = vcmp.ge.s32.totalorder %v224, %v240
        %v249 = vsel %vm241, -10000000.0, %v207
        %v250 = vsel %vm242, -10000000.0, %v208
        %v251 = vsel %vm243, -10000000.0, %v209
        %v252 = vsel %vm244, -10000000.0, %v210
        %v253 = vsel %vm245, -10000000.0, %v211
        %v254 = vsel %vm246, -10000000.0, %v212
        %v255 = vsel %vm247, -10000000.0, %v213
        %v256 = vsel %vm248, -10000000.0, %v214
        %v257 = vand.u32 2147483647, %v249
        %v258 = vand.u32 2147483647, %v250
        %v259 = vand.u32 2147483647, %v251
        %v260 = vand.u32 2147483647, %v252
        %v261 = vand.u32 2147483647, %v253
        %v262 = vand.u32 2147483647, %v254
        %v263 = vand.u32 2147483647, %v255
        %v264 = vand.u32 2147483647, %v256
        %vm265 = vcmask 130048
        %v266 = vsel %vm265, %v257, -inf
        %267 = vmax.xlane.f32.xlu0 %v266
        %v268 = vpop.xlane.xlu0 %267
        %v269 = vsel %vm265, %v258, -inf
        %270 = vmax.xlane.f32.xlu0 %v269
        %v271 = vpop.xlane.xlu0 %270
        %v272 = vsel %vm265, %v259, -inf
        %273 = vmax.xlane.f32.xlu0 %v272
        %v274 = vpop.xlane.xlu0 %273
        %v275 = vsel %vm265, %v260, -inf
        %276 = vmax.xlane.f32.xlu0 %v275
        %v277 = vpop.xlane.xlu0 %276
        %v278 = vsel %vm265, %v261, -inf
        %279 = vmax.xlane.f32.xlu0 %v278
        %v280 = vpop.xlane.xlu0 %279
        %v281 = vsel %vm265, %v262, -inf
        %282 = vmax.xlane.f32.xlu0 %v281
        %v283 = vpop.xlane.xlu0 %282
        %v284 = vsel %vm265, %v263, -inf
        %285 = vmax.xlane.f32.xlu0 %v284
        %v286 = vpop.xlane.xlu0 %285
        %v287 = vsel %vm265, %v264, -inf
        %288 = vmax.xlane.f32.xlu0 %v287
        %v289 = vpop.xlane.xlu0 %288
        %v290 = vsub.f32 %v257, %v268
        %v291 = vsub.f32 %v258, %v271
        %v292 = vsub.f32 %v259, %v274
        %v293 = vsub.f32 %v260, %v277
        %v294 = vsub.f32 %v261, %v280
        %v295 = vsub.f32 %v262, %v283
        %v296 = vsub.f32 %v263, %v286
        %v297 = vsub.f32 %v264, %v289
        %v298 = vmul.f32 %v290, 1.442695
        %v299 = vpow.pop %v298
        %v300 = vmul.f32 %v291, 1.442695
        %v301 = vpow.pop %v300
        %v302 = vmul.f32 %v292, 1.442695
        %v303 = vpow.pop %v302
        %v304 = vmul.f32 %v293, 1.442695
        %v305 = vpow.pop %v304
        %v306 = vmul.f32 %v294, 1.442695
        %v307 = vpow.pop %v306
        %v308 = vmul.f32 %v295, 1.442695
        %v309 = vpow.pop %v308
        %v310 = vmul.f32 %v296, 1.442695
        %v311 = vpow.pop %v310
        %v312 = vmul.f32 %v297, 1.442695
        %v313 = vpow.pop %v312
        %v314 = vsel %vm265, %v299, 0.0
        %315 = vadd.xlane.f32.xlu0 %v314
        %v316 = vpop.xlane.xlu0 %315
        %v317 = vsel %vm265, %v301, 0.0
        %318 = vadd.xlane.f32.xlu0 %v317
        %v319 = vpop.xlane.xlu0 %318
        %v320 = vsel %vm265, %v303, 0.0
        %321 = vadd.xlane.f32.xlu0 %v320
        %v322 = vpop.xlane.xlu0 %321
        %v323 = vsel %vm265, %v305, 0.0
        %324 = vadd.xlane.f32.xlu0 %v323
        %v325 = vpop.xlane.xlu0 %324
        %v326 = vsel %vm265, %v307, 0.0
        %327 = vadd.xlane.f32.xlu0 %v326
        %v328 = vpop.xlane.xlu0 %327
        %v329 = vsel %vm265, %v309, 0.0
        %330 = vadd.xlane.f32.xlu0 %v329
        %v331 = vpop.xlane.xlu0 %330
        %v332 = vsel %vm265, %v311, 0.0
        %333 = vadd.xlane.f32.xlu0 %v332
        %v334 = vpop.xlane.xlu0 %333
        %v335 = vsel %vm265, %v313, 0.0
        %336 = vadd.xlane.f32.xlu0 %v335
        %v337 = vpop.xlane.xlu0 %336
        %v338 = vrcp.pop %v316
        %v339 = vrcp.pop %v319
        %v340 = vrcp.pop %v322
        %v341 = vrcp.pop %v325
        %v342 = vrcp.pop %v328
        %v343 = vrcp.pop %v331
        %v344 = vrcp.pop %v334
        %v345 = vrcp.pop %v337
        %v346 = vmul.f32 %v316, %v338
        %v347 = vmul.f32 %v319, %v339
        %v348 = vmul.f32 %v322, %v340
        %v349 = vmul.f32 %v325, %v341
        %v350 = vmul.f32 %v328, %v342
        %v351 = vmul.f32 %v331, %v343
        %v352 = vmul.f32 %v334, %v344
        %v353 = vmul.f32 %v337, %v345
        %v354 = vsub.f32 2.0, %v346
        %v355 = vsub.f32 2.0, %v347
        %v356 = vsub.f32 2.0, %v348
        %v357 = vsub.f32 2.0, %v349
        %v358 = vsub.f32 2.0, %v350
        %v359 = vsub.f32 2.0, %v351
        %v360 = vsub.f32 2.0, %v352
        %v361 = vsub.f32 2.0, %v353
        %v362 = vmul.f32 %v338, %v354
        %v363 = vmul.f32 %v339, %v355
        %v364 = vmul.f32 %v340, %v356
        %v365 = vmul.f32 %v341, %v357
        %v366 = vmul.f32 %v342, %v358
        %v367 = vmul.f32 %v343, %v359
        %v368 = vmul.f32 %v344, %v360
        %v369 = vmul.f32 %v345, %v361
        %v370 = vmul.f32 %v299, %v362
        %v371 = vmul.f32 %v301, %v363
        %v372 = vmul.f32 %v303, %v364
        %v373 = vmul.f32 %v305, %v365
        %v374 = vmul.f32 %v307, %v366
        %v375 = vmul.f32 %v309, %v367
        %v376 = vmul.f32 %v311, %v368
        %v377 = vmul.f32 %v313, %v369
        %378 = vst.msk [vmem:[%s196] sm:$0xff] %vm265, %v370
        %379 = vst.msk [vmem:[%s196 + $0x8] sm:$0xff] %vm265, %v371
        %380 = vst.msk [vmem:[%s196 + $0x10] sm:$0xff] %vm265, %v372
        %381 = vst.msk [vmem:[%s196 + $0x18] sm:$0xff] %vm265, %v373
        %382 = vst.msk [vmem:[%s196 + $0x20] sm:$0xff] %vm265, %v374
        %383 = vst.msk [vmem:[%s196 + $0x28] sm:$0xff] %vm265, %v375
        %384 = vst.msk [vmem:[%s196 + $0x30] sm:$0xff] %vm265, %v376
        %385 = vst.msk [vmem:[%s196 + $0x38] sm:$0xff] %vm265, %v377
        %s386 = sand.u32 %s95, 1
        %s387 = scalar_lea.sflag [#allocation4], %s386
        %s388 = sand.u32 %s95, 1
        %s389 = smul.addr %s388, 64
        %s390 = scalar_lea.vmem [#allocation5], %s389
        // Predicated region
        $region33: #{tpu_custom_call.1} parent=27 // pred_check
          %p391 = pneg %p105
        $region34: #{tpu_custom_call.1} parent=27 // pred_check_branch
          %393 = sbr.rel (%p391) target = $region36
        $region35: #{tpu_custom_call.1} parent=27 // pred_region
          %s394 = smul.u32 4, %s23
          %s395 = smul.u32 2, %s24
          %397 = vsyncadd %s387, 0
          %s398 = smul.addr %s394, 2
          %s399 = sadd.s32 %s395, %s398
          %s400 = smul.addr %s399, 8
          %s401 = scalar_lea.hbm %s2, %s400
          %s402 = sshll.u32 %s390, 4
          %s403 = int_to_ptr.vmem [resolvable:$true] %s402
          %s404 = sshll.u32 %s401, 4
          %s405 = int_to_ptr.hbm [resolvable:$true] %s404
          %410 = dma.vmem_to_hbm [thread:$0]  %s403, 1024, %s405, %s387, 128, 128, 8
        $region36: #{tpu_custom_call.1} parent=27 // pred_fallthru
          _
      $region28: #{tpu_custom_call.1} parent=5 // pred_fallthru
        _
      %p411 = scmp.le.s32.totalorder 2, %s14
      // Predicated region
      $region37: #{tpu_custom_call.1} parent=5 // pred_check
        %p412 = pneg %p411
      $region38: #{tpu_custom_call.1} parent=5 // pred_check_branch
        %414 = sbr.rel (%p412) target = $region40
      $region39: #{tpu_custom_call.1} parent=5 // pred_region
        %s415 = ssub.s32 %s14, 2
        // Predicated region
        $region41: #{tpu_custom_call.1} parent=39 // pred_check
          %p416 = pneg %p111
        $region42: #{tpu_custom_call.1} parent=39 // pred_check_branch
          %418 = sbr.rel (%p416) target = $region44
        $region43: #{tpu_custom_call.1} parent=39 // pred_region
          %s419 = sand.u32 %s96, 1
          %s420 = scalar_lea.sflag [#allocation4], %s419
          %s421 = sand.u32 %s96, 1
          %s422 = smul.addr %s421, 64
          %s423 = scalar_lea.vmem [#allocation5], %s422
          %425 = dma.done %s420, 1024
        $region44: #{tpu_custom_call.1} parent=39 // pred_fallthru
          _
      $region40: #{tpu_custom_call.1} parent=5 // pred_fallthru
        _
    $region6: #{tpu_custom_call.1} parent=1 // loop_footer
      %s18 = sadd.s32 1, %s14
    $region7: #{tpu_custom_call.1} parent=1 // loop_footer_branch
      %13 = sbr.rel target = $region3
    $region8: #{tpu_custom_call.1} parent=1 // loop_exit
      _
    %426 = vsyncpa [#allocation3], 1
    %s427 = scalar_lea.sflag [#allocation3], 1
    %428 = vsyncpa %s427, 1
    %429 = vsyncpa [#allocation4], 1
    %s430 = scalar_lea.sflag [#allocation4], 1
    %431 = vsyncpa %s430, 1

</llo_original>
